<compile_context>
chip_gen: v6e
topology: v6e:2x2x1
jax: 0.10.0
libtpu: 0.0.40
codegen_flags: <defaults>
</compile_context>

<pallas_src>
import functools

import jax
import jax.numpy as jnp
from jax.experimental import pallas as pl
from jax.experimental.pallas import tpu as pltpu

_SUBLANE = 8
# Below this many rows a second grid step (for v7x's 2nd TensorCore) would not
# amortize the ~0.35us per-step overhead, so a single tile is kept.
_MIN_ROWS_FOR_SPLIT = 1024


def _cdiv(a, b):
    return -(-a // b)


def _round_up(n, m):
    return _cdiv(n, m) * m


def _mlp_kernel(x_ref, w1_ref, b1_ref, w2_ref, b2_ref, w3_ref, b3_ref, o_ref):
    # fc1 + relu: bf16 MXU matmul, f32 accumulation; bias-add / relu on the VPU
    # in f32 ride the free slots under the MXU.
    h1 = jnp.dot(x_ref[...], w1_ref[...], preferred_element_type=jnp.float32)
    h1 = jnp.maximum(h1 + b1_ref[...], 0.0)
    # fc2 + relu
    h2 = jnp.dot(h1.astype(jnp.bfloat16), w2_ref[...],
                 preferred_element_type=jnp.float32)
    h2 = jnp.maximum(h2 + b2_ref[...], 0.0)
    # fc3 (no activation).  Output tile is (tm, out_size): a few masked partial
    # stores, but no artificial 128-lane HBM writeback.
    out = jnp.dot(h2.astype(jnp.bfloat16), w3_ref[...],
                  preferred_element_type=jnp.float32)
    o_ref[...] = (out + b3_ref[...]).astype(o_ref.dtype)


@functools.partial(jax.jit, static_argnames=("block_m",))
def linear_nn_forward(x, params, block_m=4096):
    """x: (B, ...) arbitrary trailing dims; flattened to (B, input_size)."""
    w1, b1, w2, b2, w3, b3 = params
    in_features = w1.shape[0]
    hidden = w1.shape[1]
    out_size = w3.shape[1]

    b = x.shape[0]
    x2d = x.reshape(b, -1)
    if x2d.shape[1] != in_features:
        raise ValueError(
            f"flattened input has {x2d.shape[1]} features, expected {in_features}")

    # bf16 matmul operands (native MXU input dtype, halves the x HBM read);
    # biases stay f32 for the f32 epilogue.
    x2d = x2d.astype(jnp.bfloat16)
    w1 = w1.astype(jnp.bfloat16)
    w2 = w2.astype(jnp.bfloat16)
    w3 = w3.astype(jnp.bfloat16)
    b1 = b1.astype(jnp.float32)
    b2 = b2.astype(jnp.float32)
    b3 = b3.astype(jnp.float32)

    # Near-equal row tiles (multiple of 8 sublanes), at most ~block_m rows each.
    n_tiles = _cdiv(b, block_m)
    if n_tiles == 1 and b >= _MIN_ROWS_FOR_SPLIT:
        n_tiles = 2  # keep both v7x TensorCores busy; harmless on v5e/v6e
    tm = _round_up(_cdiv(b, n_tiles), _SUBLANE)
    b_pad = n_tiles * tm
    if b_pad != b:
        x2d = jnp.pad(x2d, ((0, b_pad - b), (0, 0)))

    grid = (n_tiles,)

    def resident(a):
        # Constant block index across the grid; single buffer (never re-fetched).
        return pl.BlockSpec(a.shape, lambda i, nd=a.ndim: (0,) * nd,
                            pipeline_mode=pl.Buffered(1))

    x_spec = pl.BlockSpec((tm, in_features), lambda i: (i, 0))
    out_spec = pl.BlockSpec((tm, out_size), lambda i: (i, 0))

    flops = 2 * b_pad * (in_features * hidden + hidden * hidden + hidden * out_size)
    bytes_accessed = (
        2 * (x2d.size + w1.size + w2.size + w3.size)      # bf16 reads
        + 4 * (b1.size + b2.size + b3.size)               # f32 bias reads
        + 4 * b_pad * out_size                            # f32 output write
    )

    out = pl.pallas_call(
        _mlp_kernel,
        out_shape=jax.ShapeDtypeStruct((b_pad, out_size), jnp.float32),
        grid=grid,
        in_specs=[
            x_spec,
            resident(w1), resident(b1),
            resident(w2), resident(b2),
            resident(w3), resident(b3),
        ],
        out_specs=out_spec,
        compiler_params=pltpu.CompilerParams(
            dimension_semantics=("parallel",),
            vmem_limit_bytes=32 * 1024 * 1024,
        ),
        cost_estimate=pl.CostEstimate(
            flops=flops, transcendentals=0, bytes_accessed=bytes_accessed),
    )(x2d, w1, b1, w2, b2, w3, b3)

    return out[:b]


def init_params(key, input_size, output_size, hidden=64):
    """Deterministic init mimicking nn.Linear's U(-1/sqrt(fan_in), 1/sqrt(fan_in)).
    Weights returned as (in, out) = transposed PyTorch layout."""
    def linear(k, fan_in, fan_out):
        kw, kb = jax.random.split(k)
        bound = 1.0 / jnp.sqrt(fan_in)
        w = jax.random.uniform(kw, (fan_in, fan_out), jnp.float32, -bound, bound)
        b = jax.random.uniform(kb, (1, fan_out), jnp.float32, -bound, bound)
        return w, b

    k1, k2, k3 = jax.random.split(key, 3)
    w1, b1 = linear(k1, input_size, hidden)
    w2, b2 = linear(k2, hidden, hidden)
    w3, b3 = linear(k3, hidden, output_size)
    return (w1, b1, w2, b2, w3, b3)


def reference_forward(x, params):
    """Pure-JAX f32 reference reproducing the PyTorch forward."""
    w1, b1, w2, b2, w3, b3 = params
    h = x.reshape(x.shape[0], -1).astype(jnp.float32)
    h = jnp.maximum(h @ w1 + b1, 0.0)
    h = jnp.maximum(h @ w2 + b2, 0.0)
    return h @ w3 + b3


if __name__ == "__main__":
    key = jax.random.PRNGKey(0)
    kx1, kx2, kx3, kp = jax.random.split(key, 4)

    input_size = 16   # e.g. Mackey-Glass window length
    output_size = 4
    params = init_params(kp, input_size, output_size)

    # bf16 matmuls -> relaxed tolerance vs. the f32 reference.
    ATOL, RTOL = 5e-2, 5e-2

    # Small single-tile case.
    x_small = jax.random.normal(kx1, (8, input_size), jnp.float32)
    out_small = jax.block_until_ready(linear_nn_forward(x_small, params))
    ref_small = reference_forward(x_small, params)
    assert out_small.shape == (8, output_size)
    assert jnp.allclose(out_small, ref_small, atol=ATOL, rtol=RTOL), (
        float(jnp.max(jnp.abs(out_small - ref_small))))

    # Multi-dim input (exercises the x.view(B, -1) flatten): (5, 4, 4) -> (5, 16).
    x_nd = jax.random.normal(kx2, (5, 4, 4), jnp.float32)
    out_nd = jax.block_until_ready(linear_nn_forward(x_nd, params))
    ref_nd = reference_forward(x_nd, params)
    assert out_nd.shape == (5, output_size)
    assert jnp.allclose(out_nd, ref_nd, atol=ATOL, rtol=RTOL)

    # Batched case: multiple near-equal row tiles + batch padding.
    x_big = jax.random.normal(kx3, (300, input_size), jnp.float32)
    out_big = jax.block_until_ready(linear_nn_forward(x_big, params, block_m=128))
    ref_big = reference_forward(x_big, params)
    assert out_big.shape == (300, output_size)
    assert jnp.allclose(out_big, ref_big, atol=ATOL, rtol=RTOL)

    print("KERNEL_OK")
</pallas_src>

<mosaic_0001>
module attributes {stable_mosaic.version = 11 : i64} {
  func.func @_mlp_kernel(%arg0: i32, %arg1: memref<8x16xbf16, #tpu.memory_space<vmem>>, %arg2: memref<16x64xbf16, #tpu.memory_space<vmem>>, %arg3: memref<1x64xf32, #tpu.memory_space<vmem>>, %arg4: memref<64x64xbf16, #tpu.memory_space<vmem>>, %arg5: memref<1x64xf32, #tpu.memory_space<vmem>>, %arg6: memref<64x4xbf16, #tpu.memory_space<vmem>>, %arg7: memref<1x4xf32, #tpu.memory_space<vmem>>, %arg8: memref<8x4xf32, #tpu.memory_space<vmem>>) attributes {dimension_semantics = [#tpu.dimension_semantics<parallel>], iteration_bounds = array<i64: 1>, scalar_prefetch = 0 : i64, scratch_operands = 0 : i64, tpu.core_type = #tpu.core_type<tc>, window_params = [{transform_indices = @transform_0, window_bounds = array<i64: 8, 16>}, {pipeline_mode = #tpu.pipeline_mode<synchronous>, transform_indices = @transform_1, window_bounds = array<i64: 16, 64>}, {pipeline_mode = #tpu.pipeline_mode<synchronous>, transform_indices = @transform_2, window_bounds = array<i64: 1, 64>}, {pipeline_mode = #tpu.pipeline_mode<synchronous>, transform_indices = @transform_3, window_bounds = array<i64: 64, 64>}, {pipeline_mode = #tpu.pipeline_mode<synchronous>, transform_indices = @transform_4, window_bounds = array<i64: 1, 64>}, {pipeline_mode = #tpu.pipeline_mode<synchronous>, transform_indices = @transform_5, window_bounds = array<i64: 64, 4>}, {pipeline_mode = #tpu.pipeline_mode<synchronous>, transform_indices = @transform_6, window_bounds = array<i64: 1, 4>}, {transform_indices = @transform_7, window_bounds = array<i64: 8, 4>}]} {
    %c0 = arith.constant 0 : index
    %c0_0 = arith.constant 0 : index
    %0 = vector.load %arg1[%c0, %c0_0] : memref<8x16xbf16, #tpu.memory_space<vmem>>, vector<8x16xbf16>
    %c0_1 = arith.constant 0 : index
    %c0_2 = arith.constant 0 : index
    %1 = vector.load %arg2[%c0_1, %c0_2] : memref<16x64xbf16, #tpu.memory_space<vmem>>, vector<16x64xbf16>
    %cst = arith.constant dense<0.000000e+00> : vector<8x64xf32>
    %2 = tpu.matmul %0, %1, %cst {dimension_numbers = #tpu.dot_dimension_numbers<[1], [0], [0], [1], [0, 0, 1, 1], [], []>} : vector<8x16xbf16>, vector<16x64xbf16>, vector<8x64xf32> -> vector<8x64xf32>
    %c0_3 = arith.constant 0 : index
    %c0_4 = arith.constant 0 : index
    %3 = vector.load %arg3[%c0_3, %c0_4] : memref<1x64xf32, #tpu.memory_space<vmem>>, vector<1x64xf32>
    %4 = vector.broadcast %3 : vector<1x64xf32> to vector<8x64xf32>
    %5 = arith.addf %2, %4 : vector<8x64xf32>
    %cst_5 = arith.constant 0.000000e+00 : f32
    %6 = vector.broadcast %cst_5 : f32 to vector<8x64xf32>
    %7 = arith.maximumf %5, %6 : vector<8x64xf32>
    %8 = arith.truncf %7 : vector<8x64xf32> to vector<8x64xbf16>
    %c0_6 = arith.constant 0 : index
    %c0_7 = arith.constant 0 : index
    %9 = vector.load %arg4[%c0_6, %c0_7] : memref<64x64xbf16, #tpu.memory_space<vmem>>, vector<64x64xbf16>
    %cst_8 = arith.constant dense<0.000000e+00> : vector<8x64xf32>
    %10 = tpu.matmul %8, %9, %cst_8 {dimension_numbers = #tpu.dot_dimension_numbers<[1], [0], [0], [1], [0, 0, 1, 1], [], []>} : vector<8x64xbf16>, vector<64x64xbf16>, vector<8x64xf32> -> vector<8x64xf32>
    %c0_9 = arith.constant 0 : index
    %c0_10 = arith.constant 0 : index
    %11 = vector.load %arg5[%c0_9, %c0_10] : memref<1x64xf32, #tpu.memory_space<vmem>>, vector<1x64xf32>
    %12 = vector.broadcast %11 : vector<1x64xf32> to vector<8x64xf32>
    %13 = arith.addf %10, %12 : vector<8x64xf32>
    %cst_11 = arith.constant 0.000000e+00 : f32
    %14 = vector.broadcast %cst_11 : f32 to vector<8x64xf32>
    %15 = arith.maximumf %13, %14 : vector<8x64xf32>
    %16 = arith.truncf %15 : vector<8x64xf32> to vector<8x64xbf16>
    %c0_12 = arith.constant 0 : index
    %c0_13 = arith.constant 0 : index
    %17 = vector.load %arg6[%c0_12, %c0_13] : memref<64x4xbf16, #tpu.memory_space<vmem>>, vector<64x4xbf16>
    %cst_14 = arith.constant dense<0.000000e+00> : vector<8x4xf32>
    %18 = tpu.matmul %16, %17, %cst_14 {dimension_numbers = #tpu.dot_dimension_numbers<[1], [0], [0], [1], [0, 0, 1, 1], [], []>} : vector<8x64xbf16>, vector<64x4xbf16>, vector<8x4xf32> -> vector<8x4xf32>
    %c0_15 = arith.constant 0 : index
    %c0_16 = arith.constant 0 : index
    %19 = vector.load %arg7[%c0_15, %c0_16] : memref<1x4xf32, #tpu.memory_space<vmem>>, vector<1x4xf32>
    %20 = vector.broadcast %19 : vector<1x4xf32> to vector<8x4xf32>
    %21 = arith.addf %18, %20 : vector<8x4xf32>
    %c0_17 = arith.constant 0 : index
    %c0_18 = arith.constant 0 : index
    %22 = vector.load %arg8[%c0_17, %c0_18] : memref<8x4xf32, #tpu.memory_space<vmem>>, vector<8x4xf32>
    tpu.vector_store %arg8[%c0_17, %c0_18], %21 {strides = array<i32>} : memref<8x4xf32, #tpu.memory_space<vmem>>, vector<8x4xf32>,
    return
  }
  func.func @transform_0(%arg0: i32) -> (i32, i32) {
    %c0_i32 = arith.constant 0 : i32
    %c0_i32_0 = arith.constant 0 : i32
    return %arg0, %c0_i32 : i32, i32
  }
  func.func @transform_1(%arg0: i32) -> (i32, i32) {
    %c0_i32 = arith.constant 0 : i32
    %c0_i32_0 = arith.constant 0 : i32
    %c0_i32_1 = arith.constant 0 : i32
    return %c0_i32, %c0_i32_0 : i32, i32
  }
  func.func @transform_2(%arg0: i32) -> (i32, i32) {
    %c0_i32 = arith.constant 0 : i32
    %c0_i32_0 = arith.constant 0 : i32
    %c0_i32_1 = arith.constant 0 : i32
    return %c0_i32, %c0_i32_0 : i32, i32
  }
  func.func @transform_3(%arg0: i32) -> (i32, i32) {
    %c0_i32 = arith.constant 0 : i32
    %c0_i32_0 = arith.constant 0 : i32
    %c0_i32_1 = arith.constant 0 : i32
    return %c0_i32, %c0_i32_0 : i32, i32
  }
  func.func @transform_4(%arg0: i32) -> (i32, i32) {
    %c0_i32 = arith.constant 0 : i32
    %c0_i32_0 = arith.constant 0 : i32
    %c0_i32_1 = arith.constant 0 : i32
    return %c0_i32, %c0_i32_0 : i32, i32
  }
  func.func @transform_5(%arg0: i32) -> (i32, i32) {
    %c0_i32 = arith.constant 0 : i32
    %c0_i32_0 = arith.constant 0 : i32
    %c0_i32_1 = arith.constant 0 : i32
    return %c0_i32, %c0_i32_0 : i32, i32
  }
  func.func @transform_6(%arg0: i32) -> (i32, i32) {
    %c0_i32 = arith.constant 0 : i32
    %c0_i32_0 = arith.constant 0 : i32
    %c0_i32_1 = arith.constant 0 : i32
    return %c0_i32, %c0_i32_0 : i32, i32
  }
  func.func @transform_7(%arg0: i32) -> (i32, i32) {
    %c0_i32 = arith.constant 0 : i32
    %c0_i32_0 = arith.constant 0 : i32
    return %arg0, %c0_i32 : i32, i32
  }
}

</mosaic_0001>

<llo_original>
// kernel: linear_nn_forward.1
$region0: #{linear_nn_forward.1}
  #allocation0 [shape = 'u32[]', space=smem, size = 0x4, offset = 0x4, fixed_abs, tag = 'smem constant byte address 0x4 - core index']
  #allocation1 [shape = 'u32[144,128]{1,0:T(1,128)}', space=vmem, size = 0x12000, scoped, tag = 'internal scratch']
  %s0 = inlined_call_operand.vmem [shape: bf16[8,16], index: 0, kind: input, shape index: {}]
  %s1 = inlined_call_operand.vmem [shape: bf16[16,64], index: 1, kind: input, shape index: {}]
  %s2 = inlined_call_operand.vmem [shape: f32[1,64], index: 2, kind: input, shape index: {}]
  %s3 = inlined_call_operand.vmem [shape: bf16[64,64], index: 3, kind: input, shape index: {}]
  %s4 = inlined_call_operand.vmem [shape: f32[1,64], index: 4, kind: input, shape index: {}]
  %s5 = inlined_call_operand.vmem [shape: bf16[64,4], index: 5, kind: input, shape index: {}]
  %s6 = inlined_call_operand.vmem [shape: f32[1,4], index: 6, kind: input, shape index: {}]
  %s7 = inlined_call_operand.vmem [shape: f32[8,4], index: 7, kind: output, shape index: {}]
  %s8 = sld [smem:[#allocation0]]
  $region38: #{linear_nn_forward.1} parent=0
    _
  %s10 = ssub.s32 1, %s8
  %s11 = scalar_select 0, %s10, %s8
  // Predicated region
  $region2: #{linear_nn_forward.1} parent=0 // pred_check
    _
  $region3: #{linear_nn_forward.1} parent=0 // pred_check_branch
    %13 = sbr.rel (0) target = $region5
  $region4: #{linear_nn_forward.1} parent=0 // pred_region
    _
  $region5: #{linear_nn_forward.1} parent=0 // pred_fallthru
    _
  // Predicated region
  $region6: #{linear_nn_forward.1} parent=0 // pred_check
    _
  $region7: #{linear_nn_forward.1} parent=0 // pred_check_branch
    %15 = sbr.rel (0) target = $region9
  $region8: #{linear_nn_forward.1} parent=0 // pred_region
    _
  $region9: #{linear_nn_forward.1} parent=0 // pred_fallthru
    _
  // Predicated region
  $region10: #{linear_nn_forward.1} parent=0 // pred_check
    _
  $region11: #{linear_nn_forward.1} parent=0 // pred_check_branch
    %17 = sbr.rel (0) target = $region13
  $region12: #{linear_nn_forward.1} parent=0 // pred_region
    _
  $region13: #{linear_nn_forward.1} parent=0 // pred_fallthru
    _
  // Predicated region
  $region14: #{linear_nn_forward.1} parent=0 // pred_check
    _
  $region15: #{linear_nn_forward.1} parent=0 // pred_check_branch
    %19 = sbr.rel (0) target = $region17
  $region16: #{linear_nn_forward.1} parent=0 // pred_region
    _
  $region17: #{linear_nn_forward.1} parent=0 // pred_fallthru
    _
  // Predicated region
  $region18: #{linear_nn_forward.1} parent=0 // pred_check
    _
  $region19: #{linear_nn_forward.1} parent=0 // pred_check_branch
    %21 = sbr.rel (0) target = $region21
  $region20: #{linear_nn_forward.1} parent=0 // pred_region
    _
  $region21: #{linear_nn_forward.1} parent=0 // pred_fallthru
    _
  // Predicated region
  $region22: #{linear_nn_forward.1} parent=0 // pred_check
    _
  $region23: #{linear_nn_forward.1} parent=0 // pred_check_branch
    %23 = sbr.rel (0) target = $region25
  $region24: #{linear_nn_forward.1} parent=0 // pred_region
    _
  $region25: #{linear_nn_forward.1} parent=0 // pred_fallthru
    _
  // Predicated region
  $region26: #{linear_nn_forward.1} parent=0 // pred_check
    _
  $region27: #{linear_nn_forward.1} parent=0 // pred_check_branch
    %25 = sbr.rel (0) target = $region29
  $region28: #{linear_nn_forward.1} parent=0 // pred_region
    _
  $region29: #{linear_nn_forward.1} parent=0 // pred_fallthru
    _
  %v27 = vld [vmem:[%s0] sm:$0xf]
  %v28 = vld [vmem:[%s1] sm:$0xf]
  %v29 = vld [vmem:[%s1 + $0x4] sm:$0xf]
  %v30 = vld [vmem:[%s2] sm:$0x1]
  %v32 = vlaneseq
  %v33 = vshrl.u32 %v32, 7
  %v34 = vsub.s32 0, %v33
  %v35 = vrot.slane %v30, %v34
  %v39 = vunpack.c.l.b16 %v28
  %v40 = vunpack.c.l.b16 %v29
  %v41 = vpack.c.b16 %v40, %v39
  %vm43 = vcmask 130048
  %v45 = vsel %vm43, %v27, 0
  %47 = vmatprep.subr.bf16.mxu0 0
  %48 = vmatpush1.bf16.msra.mxu0 0
  %49 = vmatprep.subr.bf16.mxu0 0
  %50 = vmatpush1.bf16.msra.mxu0 0
  %51 = vmatprep.subr.bf16.mxu0 0
  %52 = vmatpush1.bf16.msra.mxu0 0
  %53 = vmatprep.subr.bf16.mxu0 0
  %54 = vmatpush1.bf16.msra.mxu0 0
  %55 = vmatprep.subr.bf16.mxu0 0
  %56 = vmatpush1.bf16.msra.mxu0 0
  %57 = vmatprep.subr.bf16.mxu0 0
  %58 = vmatpush1.bf16.msra.mxu0 0
  %59 = vmatprep.subr.bf16.mxu0 0
  %60 = vmatpush1.bf16.msra.mxu0 0
  %61 = vmatprep.subr.bf16.mxu0 0
  %62 = vmatpush1.bf16.msra.mxu0 %v41
  %63 = vmatprep.subr.bf16.mxu0 0
  %64 = vmatpush2.bf16.msra.mxu0 0
  %65 = vmatprep.subr.bf16.mxu0 0
  %66 = vmatpush2.bf16.msra.mxu0 0
  %67 = vmatprep.subr.bf16.mxu0 0
  %68 = vmatpush2.bf16.msra.mxu0 0
  %69 = vmatprep.subr.bf16.mxu0 0
  %70 = vmatpush2.bf16.msra.mxu0 0
  %71 = vmatprep.subr.bf16.mxu0 0
  %72 = vmatpush2.bf16.msra.mxu0 0
  %73 = vmatprep.subr.bf16.mxu0 0
  %74 = vmatpush2.bf16.msra.mxu0 0
  %75 = vmatprep.subr.bf16.mxu0 0
  %76 = vmatpush2.bf16.msra.mxu0 0
  %77 = vmatprep.subr.bf16.mxu0 0
  %78 = vmatpush2.bf16.msra.mxu0 0
  %79 = vmatprep.mubr.bf16.mxu0 0
  %80 = vmatmul.mubr.bf16.gmra.mxu0 %v45
  %v81 = vpop.f32.mrf.mxu0
  %v82 = vadd.f32 %v35, %v81
  %v83 = vpop.f32.mrf.mxu0
  %v84 = vpop.f32.mrf.mxu0
  %v85 = vpop.f32.mrf.mxu0
  %86 = vdwg.mxu0
  %v87 = vmax.f32 %v82, 0.0
  %v88 = vpack.c.bf16 %v87, %v87
  %v89 = vld [vmem:[%s3] sm:$0xf]
  %v90 = vld [vmem:[%s3 + $0x4] sm:$0xf]
  %v91 = vld [vmem:[%s3 + $0x8] sm:$0xf]
  %v92 = vld [vmem:[%s3 + $0xc] sm:$0xf]
  %v93 = vld [vmem:[%s3 + $0x10] sm:$0xf]
  %v94 = vld [vmem:[%s3 + $0x14] sm:$0xf]
  %v95 = vld [vmem:[%s3 + $0x18] sm:$0xf]
  %v96 = vld [vmem:[%s3 + $0x1c] sm:$0xf]
  %v97 = vld [vmem:[%s4] sm:$0x1]
  %v99 = vlaneseq
  %v100 = vshrl.u32 %v99, 7
  %v101 = vsub.s32 0, %v100
  %v102 = vrot.slane %v97, %v101
  %v112 = vunpack.c.l.b16 %v89
  %v113 = vunpack.c.l.b16 %v90
  %v114 = vunpack.c.l.b16 %v91
  %v115 = vunpack.c.l.b16 %v92
  %v116 = vunpack.c.l.b16 %v93
  %v117 = vunpack.c.l.b16 %v94
  %v118 = vunpack.c.l.b16 %v95
  %v119 = vunpack.c.l.b16 %v96
  %v120 = vpack.c.b16 %v113, %v112
  %v121 = vpack.c.b16 %v115, %v114
  %v122 = vpack.c.b16 %v117, %v116
  %v123 = vpack.c.b16 %v119, %v118
  %vm128 = vcmask 523264
  %v130 = vsel %vm128, %v88, 0
  %132 = vmatprep.subr.bf16.mxu0 0
  %133 = vmatpush1.bf16.msra.mxu0 0
  %134 = vmatprep.subr.bf16.mxu0 0
  %135 = vmatpush1.bf16.msra.mxu0 0
  %136 = vmatprep.subr.bf16.mxu0 0
  %137 = vmatpush1.bf16.msra.mxu0 0
  %138 = vmatprep.subr.bf16.mxu0 0
  %139 = vmatpush1.bf16.msra.mxu0 0
  %140 = vmatprep.subr.bf16.mxu0 0
  %141 = vmatpush1.bf16.msra.mxu0 %v123
  %142 = vmatprep.subr.bf16.mxu0 0
  %143 = vmatpush1.bf16.msra.mxu0 %v122
  %144 = vmatprep.subr.bf16.mxu0 0
  %145 = vmatpush1.bf16.msra.mxu0 %v121
  %146 = vmatprep.subr.bf16.mxu0 0
  %147 = vmatpush1.bf16.msra.mxu0 %v120
  %148 = vmatprep.subr.bf16.mxu0 0
  %149 = vmatpush2.bf16.msra.mxu0 0
  %150 = vmatprep.subr.bf16.mxu0 0
  %151 = vmatpush2.bf16.msra.mxu0 0
  %152 = vmatprep.subr.bf16.mxu0 0
  %153 = vmatpush2.bf16.msra.mxu0 0
  %154 = vmatprep.subr.bf16.mxu0 0
  %155 = vmatpush2.bf16.msra.mxu0 0
  %156 = vmatprep.subr.bf16.mxu0 0
  %157 = vmatpush2.bf16.msra.mxu0 0
  %158 = vmatprep.subr.bf16.mxu0 0
  %159 = vmatpush2.bf16.msra.mxu0 0
  %160 = vmatprep.subr.bf16.mxu0 0
  %161 = vmatpush2.bf16.msra.mxu0 0
  %162 = vmatprep.subr.bf16.mxu0 0
  %163 = vmatpush2.bf16.msra.mxu0 0
  %164 = vmatprep.mubr.bf16.mxu0 0
  %165 = vmatmul.mubr.bf16.gmra.mxu0 %v130
  %v166 = vpop.f32.mrf.mxu0
  %v167 = vadd.f32 %v102, %v166
  %v168 = vpop.f32.mrf.mxu0
  %v169 = vpop.f32.mrf.mxu0
  %v170 = vpop.f32.mrf.mxu0
  %171 = vdwg.mxu0
  %v172 = vmax.f32 %v167, 0.0
  %v173 = vpack.c.bf16 %v172, %v172
  %v174 = vld [vmem:[%s5] sm:$0xf]
  %v175 = vld [vmem:[%s5 + $0x4] sm:$0xf]
  %v176 = vld [vmem:[%s5 + $0x8] sm:$0xf]
  %v177 = vld [vmem:[%s5 + $0xc] sm:$0xf]
  %v178 = vld [vmem:[%s5 + $0x10] sm:$0xf]
  %v179 = vld [vmem:[%s5 + $0x14] sm:$0xf]
  %v180 = vld [vmem:[%s5 + $0x18] sm:$0xf]
  %v181 = vld [vmem:[%s5 + $0x1c] sm:$0xf]
  %v182 = vld [vmem:[%s6] sm:$0x1]
  %v184 = vlaneseq
  %v185 = vshrl.u32 %v184, 7
  %v186 = vsub.s32 0, %v185
  %v187 = vrot.slane %v182, %v186
  %v197 = vunpack.c.l.b16 %v174
  %v198 = vunpack.c.l.b16 %v175
  %v199 = vunpack.c.l.b16 %v176
  %v200 = vunpack.c.l.b16 %v177
  %v201 = vunpack.c.l.b16 %v178
  %v202 = vunpack.c.l.b16 %v179
  %v203 = vunpack.c.l.b16 %v180
  %v204 = vunpack.c.l.b16 %v181
  %v205 = vpack.c.b16 %v198, %v197
  %v206 = vpack.c.b16 %v200, %v199
  %v207 = vpack.c.b16 %v202, %v201
  %v208 = vpack.c.b16 %v204, %v203
  %v214 = vsel %vm128, %v173, 0
  %216 = vmatprep.subr.bf16.mxu0 0
  %217 = vmatpush1.bf16.msra.mxu0 0
  %218 = vmatprep.subr.bf16.mxu0 0
  %219 = vmatpush1.bf16.msra.mxu0 0
  %220 = vmatprep.subr.bf16.mxu0 0
  %221 = vmatpush1.bf16.msra.mxu0 0
  %222 = vmatprep.subr.bf16.mxu0 0
  %223 = vmatpush1.bf16.msra.mxu0 0
  %224 = vmatprep.subr.bf16.mxu0 0
  %225 = vmatpush1.bf16.msra.mxu0 %v208
  %226 = vmatprep.subr.bf16.mxu0 0
  %227 = vmatpush1.bf16.msra.mxu0 %v207
  %228 = vmatprep.subr.bf16.mxu0 0
  %229 = vmatpush1.bf16.msra.mxu0 %v206
  %230 = vmatprep.subr.bf16.mxu0 0
  %231 = vmatpush1.bf16.msra.mxu0 %v205
  %232 = vmatprep.subr.bf16.mxu0 0
  %233 = vmatpush2.bf16.msra.mxu0 0
  %234 = vmatprep.subr.bf16.mxu0 0
  %235 = vmatpush2.bf16.msra.mxu0 0
  %236 = vmatprep.subr.bf16.mxu0 0
  %237 = vmatpush2.bf16.msra.mxu0 0
  %238 = vmatprep.subr.bf16.mxu0 0
  %239 = vmatpush2.bf16.msra.mxu0 0
  %240 = vmatprep.subr.bf16.mxu0 0
  %241 = vmatpush2.bf16.msra.mxu0 0
  %242 = vmatprep.subr.bf16.mxu0 0
  %243 = vmatpush2.bf16.msra.mxu0 0
  %244 = vmatprep.subr.bf16.mxu0 0
  %245 = vmatpush2.bf16.msra.mxu0 0
  %246 = vmatprep.subr.bf16.mxu0 0
  %247 = vmatpush2.bf16.msra.mxu0 0
  %248 = vmatprep.mubr.bf16.mxu0 0
  %249 = vmatmul.mubr.bf16.gmra.mxu0 %v214
  %v250 = vpop.f32.mrf.mxu0
  %v251 = vadd.f32 %v187, %v250
  %v252 = vpop.f32.mrf.mxu0
  %v253 = vpop.f32.mrf.mxu0
  %v254 = vpop.f32.mrf.mxu0
  %255 = vdwg.mxu0
  %vm256 = vcmask 31744
  %257 = vst.msk [vmem:[%s7] sm:$0xff] %vm256, %v251
  // Predicated region
  $region30: #{linear_nn_forward.1} parent=0 // pred_check
    _
  $region31: #{linear_nn_forward.1} parent=0 // pred_check_branch
    %259 = sbr.rel (0) target = $region33
  $region32: #{linear_nn_forward.1} parent=0 // pred_region
    _
  $region33: #{linear_nn_forward.1} parent=0 // pred_fallthru
    _
  // Predicated region
  $region34: #{linear_nn_forward.1} parent=0 // pred_check
    _
  $region35: #{linear_nn_forward.1} parent=0 // pred_check_branch
    %261 = sbr.rel (0) target = $region37
  $region36: #{linear_nn_forward.1} parent=0 // pred_region
    _
  $region37: #{linear_nn_forward.1} parent=0 // pred_fallthru
    _

</llo_original>
